<compile_context>
chip_gen: v7x
topology: tpu7x:2x2x1
jax: 0.10.0
libtpu: 0.0.40
codegen_flags: <defaults>
</compile_context>

<pallas_src>
import numpy as np
import jax
import jax.numpy as jnp
from jax import lax
from jax.experimental import pallas as pl
from jax.experimental.pallas import tpu as pltpu


def make_haar_filters() -> np.ndarray:
    """Deterministic Haar filters, same construction as get_wav()."""
    lp = (1.0 / np.sqrt(2.0)) * np.ones((1, 2))
    hp = (1.0 / np.sqrt(2.0)) * np.ones((1, 2))
    hp[0, 0] = -hp[0, 0]
    ll = lp.T * lp
    lh = lp.T * hp
    hl = hp.T * lp
    hh = hp.T * hp
    return np.stack([ll, lh, hl, hh]).astype(np.float32)  # (4, 2, 2)


def _haar_col_matrix(w_t: int):
    """(w_t, w_t) constant S with the 0.5 scale folded in.

    For a row r of width w_t:  r @ S = [ 0.5*(r[2j]+r[2j+1]) | 0.5*(r[2j+1]-r[2j]) ]
    i.e. the horizontal low-pass in columns [0, w_t/2) and high-pass in
    [w_t/2, w_t).  Built from 2-D iota so it is a pure in-kernel constant
    (no extra HBM stream, no per-step DMA).
    """
    w2 = w_t // 2
    row = lax.broadcasted_iota(jnp.int32, (w_t, w_t), 0)   # input column index
    col = lax.broadcasted_iota(jnp.int32, (w_t, w_t), 1)   # output column index
    j = jnp.where(col < w2, col, col - w2)
    even_coef = jnp.where(col < w2, 0.5, -0.5)             # coefficient of r[2j]
    s = (jnp.where(row == 2 * j, even_coef, 0.0) +
         jnp.where(row == 2 * j + 1, 0.5, 0.0))            # coefficient of r[2j+1]
    return s.astype(jnp.float32)


def _wavepool_kernel(x_ref, ll_ref, lh_ref, hl_ref, hh_ref):
    """Fused Haar pooling on one (r_t, w_t) row-stacked input block."""
    r_t, w_t = x_ref.shape
    r2, w2 = r_t // 2, w_t // 2

    # Vertical de-interleave: even / odd image rows (sublane-strided loads).
    top = x_ref[pl.ds(0, r2, 2), :].astype(jnp.float32)    # rows 0, 2, 4, ...
    bot = x_ref[pl.ds(1, r2, 2), :].astype(jnp.float32)    # rows 1, 3, 5, ...
    vsum = top + bot                                       # per pixel: [a+c, b+d]
    vdif = bot - top                                       # per pixel: [c-a, d-b]

    # Horizontal de-interleave + butterfly on the MXU (f32 accumulation).
    s_mat = _haar_col_matrix(w_t)
    zl = jnp.dot(vsum, s_mat, preferred_element_type=jnp.float32)   # [LL | LH]
    zh = jnp.dot(vdif, s_mat, preferred_element_type=jnp.float32)   # [HL | HH]

    ll_ref[...] = zl[:, :w2].astype(ll_ref.dtype)
    lh_ref[...] = zl[:, w2:].astype(lh_ref.dtype)
    hl_ref[...] = zh[:, :w2].astype(hl_ref.dtype)
    hh_ref[...] = zh[:, w2:].astype(hh_ref.dtype)


def _device_info():
    """Best-effort (vmem_capacity_bytes, num_tensorcores); safe fallbacks."""
    vmem_cap = 128 * 1024 * 1024
    num_cores = 1
    try:
        info = pltpu.get_tpu_info()
        vmem_cap = int(getattr(info, "vmem_capacity_bytes", vmem_cap))
        for attr in ("num_cores", "core_count", "tensorcores_per_chip",
                     "num_tensorcores"):
            v = getattr(info, attr, None)
            if v:
                num_cores = int(v)
                break
    except Exception:
        pass
    return vmem_cap, num_cores


def _choose_tiles(R, W, dtype, vmem_budget, num_cores):
    """Pick (input_row_tile, lane_tile) for the row-stacked 2-D layout."""
    isz = jnp.dtype(dtype).itemsize
    out_q = max(8, 32 // isz)          # output sublane quantum: 8/16/32 (f32/bf16/i8)
    row_q = 2 * out_q                  # input-row quantum (keeps row pairs whole)

    # Lane tile: full rows when modest; 256-wide chunks for very wide rows so the
    # MXU flop inflation stays small and output blocks stay lane-dense (>=128).
    if W > 512 and W % 256 == 0:
        w_t = 256
    else:
        w_t = W                        # block dim == full array dim is always legal

    # VMEM live-byte estimate per input row: double-buffered in+out blocks plus
    # f32 temporaries; the constant Haar matrix is subtracted from the budget.
    budget = max(vmem_budget - 4 * w_t * w_t, 2 * 1024 * 1024)
    per_row = w_t * (4 * isz + 16)
    max_rows = max(row_q, (budget // per_row) // row_q * row_q)

    # Enough grid steps to pipeline DMA against compute and feed every core.
    target_steps = max(2, 2 * num_cores)
    rows_for_target = pl.cdiv(pl.cdiv(R, target_steps), row_q) * row_q
    r_t = max(row_q, min(max_rows, rows_for_target, pl.cdiv(R, row_q) * row_q))

    # Multi-TensorCore parts (v7x): prefer a step count divisible by num_cores.
    if num_cores > 1:
        n_col = max(1, W // w_t)
        cand = r_t
        for _ in range(8):
            if (pl.cdiv(R, cand) * n_col) % num_cores == 0:
                r_t = cand
                break
            if cand - row_q < row_q:
                break
            cand -= row_q
    return r_t, w_t


def wave_pool(x: jax.Array):
    """Haar wavelet pooling. x: (B, C, H, W). Returns (LL, LH, HL, HH)."""
    B, C, H, W = x.shape
    # TODO(synk): PyTorch's stride-2 VALID conv silently drops an odd last
    # row/column; this implementation requires even H and W instead.
    assert H % 2 == 0 and W % 2 == 0, "wave_pool requires even H and W"
    H2, W2 = H // 2, W // 2
    R, R2 = B * C * H, B * C * H2
    isz = jnp.dtype(x.dtype).itemsize

    vmem_cap, num_cores = _device_info()
    vmem_budget = max(16 * 1024 * 1024, (vmem_cap * 3) // 8)   # 48 MiB on 128-MiB parts, 24 MiB on v7x
    vmem_limit = int(max(32 * 1024 * 1024,
                         min((vmem_cap * 3) // 4, 96 * 1024 * 1024)))

    r_t, w_t = _choose_tiles(R, W, x.dtype, vmem_budget, num_cores)
    grid = (pl.cdiv(R, r_t), max(1, W // w_t))

    # Row-stacked 2-D view of the NCHW input (free bitcast when H % 8 == 0 for
    # f32 / H % 16 == 0 for bf16; otherwise XLA inserts one layout copy).
    xf = x.reshape(R, W)

    in_spec = pl.BlockSpec((r_t, w_t), lambda i, j: (i, j))
    out_spec = pl.BlockSpec((r_t // 2, w_t // 2), lambda i, j: (i, j))
    out_struct = jax.ShapeDtypeStruct((R2, W2), x.dtype)

    outs = pl.pallas_call(
        _wavepool_kernel,
        out_shape=(out_struct,) * 4,
        grid=grid,
        in_specs=[in_spec],
        out_specs=(out_spec,) * 4,
        compiler_params=pltpu.CompilerParams(
            dimension_semantics=("parallel", "parallel"),
            vmem_limit_bytes=vmem_limit),
        cost_estimate=pl.CostEstimate(
            flops=int(2 * R * W * w_t + 8 * R * W),
            transcendentals=0,
            bytes_accessed=int(2 * R * W * isz)),
    )(xf)

    # Natural contiguous sub-band layouts -> just reshape back to NCHW.
    return tuple(o.reshape(B, C, H2, W2) for o in outs)


def _reference_wavepool(x: jax.Array, weights: jax.Array):
    """Plain-JAX depthwise conv reference (mirrors nn.Conv2d groups=C)."""
    C = x.shape[1]
    outs = []
    for f in range(4):
        w = jnp.broadcast_to(weights[f][None, None], (C, 1, 2, 2))
        y = jax.lax.conv_general_dilated(
            x, w, window_strides=(2, 2), padding="VALID",
            dimension_numbers=("NCHW", "OIHW", "NCHW"),
            feature_group_count=C)
        outs.append(y)
    return tuple(outs)


if __name__ == "__main__":
    key = jax.random.PRNGKey(0)
    B, C, H, W = 2, 4, 16, 16
    x = jax.random.normal(key, (B, C, H, W), dtype=jnp.float32)

    outs = jax.jit(wave_pool)(x)
    outs = jax.block_until_ready(outs)

    weights = jnp.asarray(make_haar_filters())  # deterministic Haar parameters
    refs = _reference_wavepool(x, weights)
    for got, ref in zip(outs, refs):
        assert got.shape == (B, C, H // 2, W // 2)
        np.testing.assert_allclose(np.asarray(got), np.asarray(ref),
                                   rtol=1e-5, atol=1e-5)

    print("KERNEL_OK")
</pallas_src>

<mosaic_0001>
module attributes {stable_mosaic.version = 11 : i64} {
  func.func @_wavepool_kernel(%arg0: i32, %arg1: i32, %arg2: memref<64x16xf32, #tpu.memory_space<vmem>>, %arg3: memref<32x8xf32, #tpu.memory_space<vmem>>, %arg4: memref<32x8xf32, #tpu.memory_space<vmem>>, %arg5: memref<32x8xf32, #tpu.memory_space<vmem>>, %arg6: memref<32x8xf32, #tpu.memory_space<vmem>>) attributes {dimension_semantics = [#tpu.dimension_semantics<parallel>, #tpu.dimension_semantics<parallel>], iteration_bounds = array<i64: 2, 1>, scalar_prefetch = 0 : i64, scratch_operands = 0 : i64, tpu.core_type = #tpu.core_type<tc>, window_params = [{transform_indices = @transform_0, window_bounds = array<i64: 64, 16>}, {transform_indices = @transform_1, window_bounds = array<i64: 32, 8>}, {transform_indices = @transform_2, window_bounds = array<i64: 32, 8>}, {transform_indices = @transform_3, window_bounds = array<i64: 32, 8>}, {transform_indices = @transform_4, window_bounds = array<i64: 32, 8>}]} {
    %c0 = arith.constant 0 : index
    %c0_0 = arith.constant 0 : index
    %0 = tpu.strided_load %arg2[%c0, %c0_0] {strides = array<i32: 2, 1>} : memref<64x16xf32, #tpu.memory_space<vmem>>, vector<32x16xf32>
    %c1 = arith.constant 1 : index
    %c0_1 = arith.constant 0 : index
    %1 = tpu.strided_load %arg2[%c1, %c0_1] {strides = array<i32: 2, 1>} : memref<64x16xf32, #tpu.memory_space<vmem>>, vector<32x16xf32>
    %2 = arith.addf %0, %1 : vector<32x16xf32>
    %3 = arith.subf %1, %0 : vector<32x16xf32>
    %4 = tpu.iota {dimensions = array<i32: 0>} : vector<16x16xi32>
    %5 = tpu.iota {dimensions = array<i32: 1>} : vector<16x16xi32>
    %c8_i32 = arith.constant 8 : i32
    %6 = vector.broadcast %c8_i32 : i32 to vector<16x16xi32>
    %7 = arith.cmpi slt, %5, %6 : vector<16x16xi32>
    %c8_i32_2 = arith.constant 8 : i32
    %8 = vector.broadcast %c8_i32_2 : i32 to vector<16x16xi32>
    %9 = arith.subi %5, %8 : vector<16x16xi32>
    %10 = arith.select %7, %5, %9 : vector<16x16xi1>, vector<16x16xi32>
    %c8_i32_3 = arith.constant 8 : i32
    %11 = vector.broadcast %c8_i32_3 : i32 to vector<16x16xi32>
    %12 = arith.cmpi slt, %5, %11 : vector<16x16xi32>
    %cst = arith.constant 5.000000e-01 : f32
    %cst_4 = arith.constant -5.000000e-01 : f32
    %13 = vector.broadcast %cst : f32 to vector<16x16xf32>
    %14 = vector.broadcast %cst_4 : f32 to vector<16x16xf32>
    %15 = arith.select %12, %13, %14 : vector<16x16xi1>, vector<16x16xf32>
    %c2_i32 = arith.constant 2 : i32
    %16 = vector.broadcast %c2_i32 : i32 to vector<16x16xi32>
    %17 = arith.muli %16, %10 : vector<16x16xi32>
    %18 = arith.cmpi eq, %4, %17 : vector<16x16xi32>
    %cst_5 = arith.constant 0.000000e+00 : f32
    %19 = vector.broadcast %cst_5 : f32 to vector<16x16xf32>
    %20 = arith.select %18, %15, %19 : vector<16x16xi1>, vector<16x16xf32>
    %c2_i32_6 = arith.constant 2 : i32
    %21 = vector.broadcast %c2_i32_6 : i32 to vector<16x16xi32>
    %22 = arith.muli %21, %10 : vector<16x16xi32>
    %c1_i32 = arith.constant 1 : i32
    %23 = vector.broadcast %c1_i32 : i32 to vector<16x16xi32>
    %24 = arith.addi %22, %23 : vector<16x16xi32>
    %25 = arith.cmpi eq, %4, %24 : vector<16x16xi32>
    %cst_7 = arith.constant 5.000000e-01 : f32
    %cst_8 = arith.constant 0.000000e+00 : f32
    %26 = vector.broadcast %cst_7 : f32 to vector<16x16xf32>
    %27 = vector.broadcast %cst_8 : f32 to vector<16x16xf32>
    %28 = arith.select %25, %26, %27 : vector<16x16xi1>, vector<16x16xf32>
    %29 = arith.addf %20, %28 : vector<16x16xf32>
    %cst_9 = arith.constant dense<0.000000e+00> : vector<32x16xf32>
    %30 = tpu.matmul %2, %29, %cst_9 {dimension_numbers = #tpu.dot_dimension_numbers<[1], [0], [0], [1], [0, 0, 1, 1], [], []>} : vector<32x16xf32>, vector<16x16xf32>, vector<32x16xf32> -> vector<32x16xf32>
    %cst_10 = arith.constant dense<0.000000e+00> : vector<32x16xf32>
    %31 = tpu.matmul %3, %29, %cst_10 {dimension_numbers = #tpu.dot_dimension_numbers<[1], [0], [0], [1], [0, 0, 1, 1], [], []>} : vector<32x16xf32>, vector<16x16xf32>, vector<32x16xf32> -> vector<32x16xf32>
    %32 = vector.extract_strided_slice %30 {offsets = [0, 0], sizes = [32, 8], strides = [1, 1]} : vector<32x16xf32> to vector<32x8xf32>
    %c0_11 = arith.constant 0 : index
    %c0_12 = arith.constant 0 : index
    %33 = vector.load %arg3[%c0_11, %c0_12] : memref<32x8xf32, #tpu.memory_space<vmem>>, vector<32x8xf32>
    tpu.vector_store %arg3[%c0_11, %c0_12], %32 {strides = array<i32>} : memref<32x8xf32, #tpu.memory_space<vmem>>, vector<32x8xf32>,
    %34 = vector.extract_strided_slice %30 {offsets = [0, 8], sizes = [32, 8], strides = [1, 1]} : vector<32x16xf32> to vector<32x8xf32>
    %c0_13 = arith.constant 0 : index
    %c0_14 = arith.constant 0 : index
    %35 = vector.load %arg4[%c0_13, %c0_14] : memref<32x8xf32, #tpu.memory_space<vmem>>, vector<32x8xf32>
    tpu.vector_store %arg4[%c0_13, %c0_14], %34 {strides = array<i32>} : memref<32x8xf32, #tpu.memory_space<vmem>>, vector<32x8xf32>,
    %36 = vector.extract_strided_slice %31 {offsets = [0, 0], sizes = [32, 8], strides = [1, 1]} : vector<32x16xf32> to vector<32x8xf32>
    %c0_15 = arith.constant 0 : index
    %c0_16 = arith.constant 0 : index
    %37 = vector.load %arg5[%c0_15, %c0_16] : memref<32x8xf32, #tpu.memory_space<vmem>>, vector<32x8xf32>
    tpu.vector_store %arg5[%c0_15, %c0_16], %36 {strides = array<i32>} : memref<32x8xf32, #tpu.memory_space<vmem>>, vector<32x8xf32>,
    %38 = vector.extract_strided_slice %31 {offsets = [0, 8], sizes = [32, 8], strides = [1, 1]} : vector<32x16xf32> to vector<32x8xf32>
    %c0_17 = arith.constant 0 : index
    %c0_18 = arith.constant 0 : index
    %39 = vector.load %arg6[%c0_17, %c0_18] : memref<32x8xf32, #tpu.memory_space<vmem>>, vector<32x8xf32>
    tpu.vector_store %arg6[%c0_17, %c0_18], %38 {strides = array<i32>} : memref<32x8xf32, #tpu.memory_space<vmem>>, vector<32x8xf32>,
    return
  }
  func.func @transform_0(%arg0: i32, %arg1: i32) -> (i32, i32) {
    %c0_i32 = arith.constant 0 : i32
    return %arg0, %arg1 : i32, i32
  }
  func.func @transform_1(%arg0: i32, %arg1: i32) -> (i32, i32) {
    %c0_i32 = arith.constant 0 : i32
    return %arg0, %arg1 : i32, i32
  }
  func.func @transform_2(%arg0: i32, %arg1: i32) -> (i32, i32) {
    %c0_i32 = arith.constant 0 : i32
    return %arg0, %arg1 : i32, i32
  }
  func.func @transform_3(%arg0: i32, %arg1: i32) -> (i32, i32) {
    %c0_i32 = arith.constant 0 : i32
    return %arg0, %arg1 : i32, i32
  }
  func.func @transform_4(%arg0: i32, %arg1: i32) -> (i32, i32) {
    %c0_i32 = arith.constant 0 : i32
    return %arg0, %arg1 : i32, i32
  }
}

</mosaic_0001>

<llo_original>
// kernel: wave_pool.1
$region0: #{wave_pool.1}
  #allocation0 [shape = 'u32[]', space=smem, size = 0x4, offset = 0x4, fixed_abs, tag = 'smem constant byte address 0x4 - core index']
  #allocation1 [shape = 'u32[144,128]{1,0:T(1,128)}', space=vmem, size = 0x12000, scoped, tag = 'internal scratch']
  %s0 = inlined_call_operand.hbm [shape: f32[128,16], index: 0, kind: input, shape index: {}]
  %s1 = inlined_call_operand.hbm [shape: f32[64,8], index: 1, kind: output, shape index: {0}]
  %s2 = inlined_call_operand.hbm [shape: f32[64,8], index: 2, kind: output, shape index: {1}]
  %s3 = inlined_call_operand.hbm [shape: f32[64,8], index: 3, kind: output, shape index: {2}]
  %s4 = inlined_call_operand.hbm [shape: f32[64,8], index: 4, kind: output, shape index: {3}]
  %5 = xla_tuple %s1, %s2, %s3, %s4
  %s6 = sld [smem:[#allocation0]]
  $region65: #{wave_pool.1} parent=0
    _
  %s8 = ssub.s32 1, %s6
  %s9 = scalar_select 0, %s8, %s6
  $region1: #{wave_pool.1} parent=0
    #allocation2 [shape = 'u8[65536]{0}', space=vmem, size = 0x10000, scoped, tag = 'input window, operand 0']
    #allocation3 [shape = 's32[2]{0}', space=sflag, size = 0x8, scoped, tag = 'scoped memory for wave_pool.1']
    #allocation4 [shape = 's32[2]{0}', space=sflag, size = 0x8, scoped, tag = 'scoped memory for wave_pool.1']
    #allocation5 [shape = 'u8[32768]{0}', space=vmem, size = 0x8000, scoped, tag = 'output window, operand 0']
    #allocation6 [shape = 'u8[32768]{0}', space=vmem, size = 0x8000, scoped, tag = 'output window, operand 1']
    #allocation7 [shape = 's32[2]{0}', space=sflag, size = 0x8, scoped, tag = 'scoped memory for wave_pool.1']
    #allocation8 [shape = 'u8[32768]{0}', space=vmem, size = 0x8000, scoped, tag = 'output window, operand 2']
    #allocation9 [shape = 'u8[32768]{0}', space=vmem, size = 0x8000, scoped, tag = 'output window, operand 3']
    #allocation10 [shape = 's32[2]{0}', space=sflag, size = 0x8, scoped, tag = 'scoped memory for wave_pool.1']
    %10 = vsyncpa [#allocation3], 0
    %s11 = scalar_lea.sflag [#allocation3], 1
    %12 = vsyncpa %s11, 0
    %13 = vsyncpa [#allocation4], 0
    %s14 = scalar_lea.sflag [#allocation4], 1
    %15 = vsyncpa %s14, 0
    %16 = vsyncpa [#allocation7], 0
    %s17 = scalar_lea.sflag [#allocation7], 1
    %18 = vsyncpa %s17, 0
    %19 = vsyncpa [#allocation10], 0
    %s20 = scalar_lea.sflag [#allocation10], 1
    %21 = vsyncpa %s20, 0
    loop: start=0, step=1, limit=4
    $region2: #{wave_pool.1} parent=1 // loop_pre_header
      _
    $region3: #{wave_pool.1} parent=1 // loop_header
      %s23 = sphi 0, %s27
      %p24 = scmp.ge.s32.totalorder %s23, 4
      %s30 = sphi 0, %s42
      %s31 = sphi 0, %s38
      %s32 = sphi 0, %s30
      %s33 = sphi 0, %s31
      %s34 = sphi 0, %s32
      %s35 = sphi 0, %s33
      %s47 = sphi 0, %s49
      %s50 = sphi 0, %s47
      %s51 = sphi 0, %s50
      %s67 = sphi 0, %s51
      %s75 = sphi 0, %s77
      %s78 = sphi 0, %s75
      %s79 = sphi 0, %s78
      %s95 = sphi 0, %s79
      %s103 = sphi 0, %s105
      %s106 = sphi 0, %s103
      %s107 = sphi 0, %s106
      %s123 = sphi 0, %s107
      %s131 = sphi 0, %s133
      %s134 = sphi 0, %s131
      %s135 = sphi 0, %s134
      %s151 = sphi 0, %s135
      %s159 = sphi 0, %s161
      %s162 = sphi 0, %s159
      %s163 = sphi 0, %s162
      %s179 = sphi 0, %s163
    $region4: #{wave_pool.1} parent=1 // loop_header_branch
      %26 = sbr.rel (%p24) target = $region8
    $region5: #{wave_pool.1} parent=1 // loop_body
      %s28 = ssub.s32 %s23, 1
      %s29 = ssub.s32 %s23, 2
      %s36 = sadd.s32 1, %s31
      %p37 = scmp.ge.s32.totalorder %s36, 1
      %s38 = scalar_select %p37, 0, %s36
      %s39 = sadd.s32 1, %s30
      %s40 = scalar_select %p37, %s39, %s30
      %p41 = scmp.ge.s32.totalorder %s40, 2
      %s42 = scalar_select %p41, 0, %s40
      %s43 = ssub.s32 %s30, %s42
      %s44 = ssub.s32 %s31, %s38
      %s45 = sor.u32 %s43, %s44
      %p46 = scmp.eq.s32.totalorder %s45, 0
      %s48 = sadd.s32 %s47, 1
      %s49 = scalar_select %p46, %s47, %s48
      %p52 = pneg %p46
      %p53 = scmp.eq.s32.totalorder %s23, 1
      %p54 = por %p52, %p53
      %p55 = scmp.ne.s32.totalorder %s47, %s50
      %p56 = scmp.eq.s32.totalorder %s23, 0
      %p57 = por %p55, %p56
      %p58 = scmp.ne.s32.totalorder %s47, %s50
      %p59 = scmp.eq.s32.totalorder %s28, 1
      %p60 = por %p58, %p59
      %p61 = scmp.ne.s32.totalorder %s50, %s51
      %p62 = scmp.eq.s32.totalorder %s28, 0
      %p63 = por %p61, %p62
      %p64 = scmp.ne.s32.totalorder %s50, %s51
      %p65 = scmp.eq.s32.totalorder %s29, 1
      %p66 = por %p64, %p65
      %p68 = scmp.ne.s32.totalorder %s51, %s67
      %p69 = scmp.eq.s32.totalorder %s29, 0
      %p70 = por %p68, %p69
      %s71 = ssub.s32 %s30, %s42
      %s72 = ssub.s32 %s31, %s38
      %s73 = sor.u32 %s71, %s72
      %p74 = scmp.eq.s32.totalorder %s73, 0
      %s76 = sadd.s32 %s75, 1
      %s77 = scalar_select %p74, %s75, %s76
      %p80 = pneg %p74
      %p81 = scmp.eq.s32.totalorder %s23, 1
      %p82 = por %p80, %p81
      %p83 = scmp.ne.s32.totalorder %s75, %s78
      %p84 = scmp.eq.s32.totalorder %s23, 0
      %p85 = por %p83, %p84
      %p86 = scmp.ne.s32.totalorder %s75, %s78
      %p87 = scmp.eq.s32.totalorder %s28, 1
      %p88 = por %p86, %p87
      %p89 = scmp.ne.s32.totalorder %s78, %s79
      %p90 = scmp.eq.s32.totalorder %s28, 0
      %p91 = por %p89, %p90
      %p92 = scmp.ne.s32.totalorder %s78, %s79
      %p93 = scmp.eq.s32.totalorder %s29, 1
      %p94 = por %p92, %p93
      %p96 = scmp.ne.s32.totalorder %s79, %s95
      %p97 = scmp.eq.s32.totalorder %s29, 0
      %p98 = por %p96, %p97
      %s99 = ssub.s32 %s30, %s42
      %s100 = ssub.s32 %s31, %s38
      %s101 = sor.u32 %s99, %s100
      %p102 = scmp.eq.s32.totalorder %s101, 0
      %s104 = sadd.s32 %s103, 1
      %s105 = scalar_select %p102, %s103, %s104
      %p108 = pneg %p102
      %p109 = scmp.eq.s32.totalorder %s23, 1
      %p110 = por %p108, %p109
      %p111 = scmp.ne.s32.totalorder %s103, %s106
      %p112 = scmp.eq.s32.totalorder %s23, 0
      %p113 = por %p111, %p112
      %p114 = scmp.ne.s32.totalorder %s103, %s106
      %p115 = scmp.eq.s32.totalorder %s28, 1
      %p116 = por %p114, %p115
      %p117 = scmp.ne.s32.totalorder %s106, %s107
      %p118 = scmp.eq.s32.totalorder %s28, 0
      %p119 = por %p117, %p118
      %p120 = scmp.ne.s32.totalorder %s106, %s107
      %p121 = scmp.eq.s32.totalorder %s29, 1
      %p122 = por %p120, %p121
      %p124 = scmp.ne.s32.totalorder %s107, %s123
      %p125 = scmp.eq.s32.totalorder %s29, 0
      %p126 = por %p124, %p125
      %s127 = ssub.s32 %s30, %s42
      %s128 = ssub.s32 %s31, %s38
      %s129 = sor.u32 %s127, %s128
      %p130 = scmp.eq.s32.totalorder %s129, 0
      %s132 = sadd.s32 %s131, 1
      %s133 = scalar_select %p130, %s131, %s132
      %p136 = pneg %p130
      %p137 = scmp.eq.s32.totalorder %s23, 1
      %p138 = por %p136, %p137
      %p139 = scmp.ne.s32.totalorder %s131, %s134
      %p140 = scmp.eq.s32.totalorder %s23, 0
      %p141 = por %p139, %p140
      %p142 = scmp.ne.s32.totalorder %s131, %s134
      %p143 = scmp.eq.s32.totalorder %s28, 1
      %p144 = por %p142, %p143
      %p145 = scmp.ne.s32.totalorder %s134, %s135
      %p146 = scmp.eq.s32.totalorder %s28, 0
      %p147 = por %p145, %p146
      %p148 = scmp.ne.s32.totalorder %s134, %s135
      %p149 = scmp.eq.s32.totalorder %s29, 1
      %p150 = por %p148, %p149
      %p152 = scmp.ne.s32.totalorder %s135, %s151
      %p153 = scmp.eq.s32.totalorder %s29, 0
      %p154 = por %p152, %p153
      %s155 = ssub.s32 %s30, %s42
      %s156 = ssub.s32 %s31, %s38
      %s157 = sor.u32 %s155, %s156
      %p158 = scmp.eq.s32.totalorder %s157, 0
      %s160 = sadd.s32 %s159, 1
      %s161 = scalar_select %p158, %s159, %s160
      %p164 = pneg %p158
      %p165 = scmp.eq.s32.totalorder %s23, 1
      %p166 = por %p164, %p165
      %p167 = scmp.ne.s32.totalorder %s159, %s162
      %p168 = scmp.eq.s32.totalorder %s23, 0
      %p169 = por %p167, %p168
      %p170 = scmp.ne.s32.totalorder %s159, %s162
      %p171 = scmp.eq.s32.totalorder %s28, 1
      %p172 = por %p170, %p171
      %p173 = scmp.ne.s32.totalorder %s162, %s163
      %p174 = scmp.eq.s32.totalorder %s28, 0
      %p175 = por %p173, %p174
      %p176 = scmp.ne.s32.totalorder %s162, %s163
      %p177 = scmp.eq.s32.totalorder %s29, 1
      %p178 = por %p176, %p177
      %p180 = scmp.ne.s32.totalorder %s163, %s179
      %p181 = scmp.eq.s32.totalorder %s29, 0
      %p182 = por %p180, %p181
      %p183 = scmp.le.s32.totalorder 1, %s23
      %p184 = scmp.lt.s32.totalorder %s23, 3
      %p185 = pnand %p183, %p184
      %p186 = pneg %p185
      // Predicated region
      $region9: #{wave_pool.1} parent=5 // pred_check
        _
      $region10: #{wave_pool.1} parent=5 // pred_check_branch
        %188 = sbr.rel (%p185) target = $region12
      $region11: #{wave_pool.1} parent=5 // pred_region
        %s189 = ssub.s32 %s23, 1
      $region12: #{wave_pool.1} parent=5 // pred_fallthru
        _
      %p190 = scmp.lt.s32.totalorder %s23, 2
      // Predicated region
      $region13: #{wave_pool.1} parent=5 // pred_check
        %p191 = pneg %p190
      $region14: #{wave_pool.1} parent=5 // pred_check_branch
        %193 = sbr.rel (%p191) target = $region16
      $region15: #{wave_pool.1} parent=5 // pred_region
        // Predicated region
        $region17: #{wave_pool.1} parent=15 // pred_check
          %p194 = pneg %p57
        $region18: #{wave_pool.1} parent=15 // pred_check_branch
          %196 = sbr.rel (%p194) target = $region20
        $region19: #{wave_pool.1} parent=15 // pred_region
          %s197 = sand.u32 %s47, 1
          %s198 = scalar_lea.sflag [#allocation3], %s197
          %s199 = sand.u32 %s47, 1
          %s200 = smul.addr %s199, 64
          %s201 = scalar_lea.vmem [#allocation2], %s200
          %s202 = smul.u32 8, %s30
          %s204 = ssub.s32 1024, 1024
          %205 = vsyncadd %s198, %s204
          %s206 = sadd.s32 %s31, %s202
          %s207 = smul.addr %s206, 128
          %s208 = scalar_lea.hbm %s0, %s207
          %s209 = sshll.u32 %s201, 4
          %s210 = int_to_ptr.vmem [resolvable:$true] %s209
          %215 = dma.hbm_to_vmem [thread:$0]  %s208, 1024, %s210, %s198, 128, 128, 8
        $region20: #{wave_pool.1} parent=15 // pred_fallthru
          _
      $region16: #{wave_pool.1} parent=5 // pred_fallthru
        _
      %p216 = scmp.le.s32.totalorder 1, %s23
      %p217 = scmp.lt.s32.totalorder %s23, 3
      %p218 = pnand %p216, %p217
      %p219 = pneg %p218
      // Predicated region
      $region21: #{wave_pool.1} parent=5 // pred_check
        _
      $region22: #{wave_pool.1} parent=5 // pred_check_branch
        %221 = sbr.rel (%p218) target = $region24
      $region23: #{wave_pool.1} parent=5 // pred_region
        %s222 = ssub.s32 %s23, 1
        %s223 = sand.u32 %s50, 1
        %s224 = scalar_lea.sflag [#allocation3], %s223
        %s225 = sand.u32 %s50, 1
        %s226 = smul.addr %s225, 64
        %s227 = scalar_lea.vmem [#allocation2], %s226
        // Predicated region
        $region25: #{wave_pool.1} parent=23 // pred_check
          %p228 = pneg %p63
        $region26: #{wave_pool.1} parent=23 // pred_check_branch
          %230 = sbr.rel (%p228) target = $region28
        $region27: #{wave_pool.1} parent=23 // pred_region
          %231 = dma.done %s224, 1024
        $region28: #{wave_pool.1} parent=23 // pred_fallthru
          _
        %s232 = sand.u32 %s50, 1
        %s233 = scalar_lea.sflag [#allocation3], %s232
        %s234 = sand.u32 %s50, 1
        %s235 = smul.addr %s234, 64
        %s236 = scalar_lea.vmem [#allocation2], %s235
        %p237 = pneg %p63
        %p238 = pneg %p60
        %p239 = pneg %p91
        %p240 = pneg %p88
        %s241 = sand.u32 %s78, 1
        %s242 = scalar_lea.sflag [#allocation4], %s241
        %s243 = sand.u32 %s78, 1
        %s244 = smul.addr %s243, 32
        %s245 = scalar_lea.vmem [#allocation5], %s244
        %p246 = pneg %p119
        %p247 = pneg %p116
        %s248 = sand.u32 %s28, 1
        %s249 = scalar_lea.sflag [#allocation7], %s248
        %s250 = sand.u32 %s106, 1
        %s251 = smul.addr %s250, 32
        %s252 = scalar_lea.vmem [#allocation6], %s251
        %p253 = pneg %p147
        %p254 = pneg %p144
        %s255 = sand.u32 %s28, 1
        %s256 = scalar_lea.sflag [#allocation7], %s255
        %s257 = sand.u32 %s134, 1
        %s258 = smul.addr %s257, 32
        %s259 = scalar_lea.vmem [#allocation8], %s258
        %p260 = pneg %p175
        %p261 = pneg %p172
        %s262 = sand.u32 %s162, 1
        %s263 = scalar_lea.sflag [#allocation10], %s262
        %s264 = sand.u32 %s162, 1
        %s265 = smul.addr %s264, 32
        %s266 = scalar_lea.vmem [#allocation9], %s265
        %s267 = smul.u32 8, %s32
        %s268 = smul.u32 4, %s32
        %s269 = smul.u32 4, %s32
        %s270 = smul.u32 4, %s32
        %s271 = smul.u32 4, %s32
        %v272 = vld [vmem:[%s227] ss:$2 sm:$0xff]
        %s273 = scalar_lea.vmem %s227, 16 [#allocation2]
        %v274 = vld [vmem:[%s273] ss:$2 sm:$0xff]
        %s275 = scalar_lea.vmem %s227, 32 [#allocation2]
        %v276 = vld [vmem:[%s275] ss:$2 sm:$0xff]
        %s277 = scalar_lea.vmem %s227, 48 [#allocation2]
        %v278 = vld [vmem:[%s277] ss:$2 sm:$0xff]
        %s279 = scalar_lea.vmem %s227, 1 [#allocation2]
        %v280 = vld [vmem:[%s279] ss:$2 sm:$0xff]
        %s281 = scalar_lea.vmem %s227, 17 [#allocation2]
        %v282 = vld [vmem:[%s281] ss:$2 sm:$0xff]
        %s283 = scalar_lea.vmem %s227, 33 [#allocation2]
        %v284 = vld [vmem:[%s283] ss:$2 sm:$0xff]
        %s285 = scalar_lea.vmem %s227, 49 [#allocation2]
        %v286 = vld [vmem:[%s285] ss:$2 sm:$0xff]
        %v287 = vadd.f32 %v272, %v280
        %v288 = vadd.f32 %v274, %v282
        %v289 = vadd.f32 %v276, %v284
        %v290 = vadd.f32 %v278, %v286
        %v291 = vsub.f32 %v280, %v272
        %v292 = vsub.f32 %v282, %v274
        %v293 = vsub.f32 %v284, %v276
        %v294 = vsub.f32 %v286, %v278
        %v295 = vlaneseq
        %v296 = vshrl.u32 %v295, 7
        %v297 = vadd.s32 %v296, 8
        %v298 = vlaneseq
        %v299 = vand.u32 %v298, 127
        %vm300 = vcmp.lt.s32.totalorder %v299, 8
        %v301 = vsub.s32 %v299, 8
        %v302 = vsel %vm300, %v299, %v301
        %v303 = vsel %vm300, 0.5, -0.5
        %v304 = vmul.u32 %v302, 2
        %vm305 = vcmp.eq.s32.totalorder %v296, %v304
        %vm306 = vcmp.eq.s32.totalorder %v297, %v304
        %v307 = vsel %vm305, %v303, 0.0
        %v308 = vsel %vm306, %v303, 0.0
        %v309 = vadd.s32 %v304, 1
        %vm310 = vcmp.eq.s32.totalorder %v296, %v309
        %vm311 = vcmp.eq.s32.totalorder %v297, %v309
        %v312 = vsel %vm310, 0.5, 0.0
        %v313 = vsel %vm311, 0.5, 0.0
        %v314 = vadd.f32 %v307, %v312
        %v315 = vadd.f32 %v308, %v313
        %vm316 = vcmask 130048
        %v318 = vsel %vm316, %v287, 0
        %v321 = vsel %vm316, %v288, 0
        %v324 = vsel %vm316, %v289, 0
        %v327 = vsel %vm316, %v290, 0
        %329 = vmatprep.subr.mxu0 0.0
        %330 = vmatpush1.msra.mxu0 %v314
        %331 = vmatprep.subr.mxu0 0.0
        %332 = vmatpush1.msra.mxu0 %v315
        %333 = vmatprep.subr.mxu0 0.0
        %334 = vmatpush1.msra.mxu0 0.0
        %335 = vmatprep.subr.mxu0 0.0
        %336 = vmatpush1.msra.mxu0 0.0
        %337 = vmatprep.subr.mxu0 0.0
        %338 = vmatpush1.msra.mxu0 0.0
        %339 = vmatprep.subr.mxu0 0.0
        %340 = vmatpush1.msra.mxu0 0.0
        %341 = vmatprep.subr.mxu0 0.0
        %342 = vmatpush1.msra.mxu0 0.0
        %343 = vmatprep.subr.mxu0 0.0
        %344 = vmatpush1.msra.mxu0 0.0
        %345 = vmatprep.subr.mxu0 0.0
        %346 = vmatpush1.msra.mxu0 0.0
        %347 = vmatprep.subr.mxu0 0.0
        %348 = vmatpush1.msra.mxu0 0.0
        %349 = vmatprep.subr.mxu0 0.0
        %350 = vmatpush1.msra.mxu0 0.0
        %351 = vmatprep.subr.mxu0 0.0
        %352 = vmatpush1.msra.mxu0 0.0
        %353 = vmatprep.subr.mxu0 0.0
        %354 = vmatpush1.msra.mxu0 0.0
        %355 = vmatprep.subr.mxu0 0.0
        %356 = vmatpush1.msra.mxu0 0.0
        %357 = vmatprep.subr.mxu0 0.0
        %358 = vmatpush1.msra.mxu0 0.0
        %359 = vmatprep.subr.mxu0 0.0
        %360 = vmatpush1.msra.mxu0 0.0
        %361 = vmatprep.subr.mxu0 0.0
        %362 = vmatpush1.msra.mxu0 0.0
        %363 = vmatprep.subr.mxu0 0.0
        %364 = vmatpush1.msra.mxu0 0.0
        %365 = vmatprep.subr.mxu0 0.0
        %366 = vmatpush1.msra.mxu0 0.0
        %367 = vmatprep.subr.mxu0 0.0
        %368 = vmatpush1.msra.mxu0 0.0
        %369 = vmatprep.subr.mxu0 0.0
        %370 = vmatpush1.msra.mxu0 0.0
        %371 = vmatprep.subr.mxu0 0.0
        %372 = vmatpush1.msra.mxu0 0.0
        %373 = vmatprep.subr.mxu0 0.0
        %374 = vmatpush1.msra.mxu0 0.0
        %375 = vmatprep.subr.mxu0 0.0
        %376 = vmatpush1.msra.mxu0 0.0
        %377 = vmatprep.subr.mxu0 0.0
        %378 = vmatpush1.msra.mxu0 0.0
        %379 = vmatprep.subr.mxu0 0.0
        %380 = vmatpush1.msra.mxu0 0.0
        %381 = vmatprep.subr.mxu0 0.0
        %382 = vmatpush1.msra.mxu0 0.0
        %383 = vmatprep.subr.mxu0 0.0
        %384 = vmatpush1.msra.mxu0 0.0
        %385 = vmatprep.subr.mxu0 0.0
        %386 = vmatpush1.msra.mxu0 0.0
        %387 = vmatprep.subr.mxu0 0.0
        %388 = vmatpush1.msra.mxu0 0.0
        %389 = vmatprep.subr.mxu0 0.0
        %390 = vmatpush1.msra.mxu0 0.0
        %391 = vmatprep.subr.mxu0 0.0
        %392 = vmatpush1.msra.mxu0 0.0
        %393 = vmatprep.mubr.f32.mxu0 0.0
        %394 = vmatmul.mubr.f32.gmra.mrb[0].mxu0 %v318
        %v395 = vpop.f32.mrb[0].mxu0
        %v396 = vadd.f32 0.0, %v395
        %v397 = vpop.f32.mrb[0].mxu0
        %398 = vmatprep.mubr.f32.mxu0 0.0
        %399 = vmatmul.mubr.f32.gmra.mrb[0].mxu0 %v321
        %v400 = vpop.f32.mrb[0].mxu0
        %v401 = vadd.f32 0.0, %v400
        %v402 = vpop.f32.mrb[0].mxu0
        %403 = vmatprep.mubr.f32.mxu0 0.0
        %404 = vmatmul.mubr.f32.gmra.mrb[0].mxu0 %v324
        %v405 = vpop.f32.mrb[0].mxu0
        %v406 = vadd.f32 0.0, %v405
        %v407 = vpop.f32.mrb[0].mxu0
        %408 = vmatprep.mubr.f32.mxu0 0.0
        %409 = vmatmul.mubr.f32.gmra.mrb[0].mxu0 %v327
        %v410 = vpop.f32.mrb[0].mxu0
        %v411 = vadd.f32 0.0, %v410
        %v412 = vpop.f32.mrb[0].mxu0
        %413 = vdwg.mxu0
        %v415 = vsel %vm316, %v291, 0
        %v418 = vsel %vm316, %v292, 0
        %v421 = vsel %vm316, %v293, 0
        %v424 = vsel %vm316, %v294, 0
        %426 = vmatprep.subr.mxu0 0.0
        %427 = vmatpush1.msra.mxu0 %v314
        %428 = vmatprep.subr.mxu0 0.0
        %429 = vmatpush1.msra.mxu0 %v315
        %430 = vmatprep.subr.mxu0 0.0
        %431 = vmatpush1.msra.mxu0 0.0
        %432 = vmatprep.subr.mxu0 0.0
        %433 = vmatpush1.msra.mxu0 0.0
        %434 = vmatprep.subr.mxu0 0.0
        %435 = vmatpush1.msra.mxu0 0.0
        %436 = vmatprep.subr.mxu0 0.0
        %437 = vmatpush1.msra.mxu0 0.0
        %438 = vmatprep.subr.mxu0 0.0
        %439 = vmatpush1.msra.mxu0 0.0
        %440 = vmatprep.subr.mxu0 0.0
        %441 = vmatpush1.msra.mxu0 0.0
        %442 = vmatprep.subr.mxu0 0.0
        %443 = vmatpush1.msra.mxu0 0.0
        %444 = vmatprep.subr.mxu0 0.0
        %445 = vmatpush1.msra.mxu0 0.0
        %446 = vmatprep.subr.mxu0 0.0
        %447 = vmatpush1.msra.mxu0 0.0
        %448 = vmatprep.subr.mxu0 0.0
        %449 = vmatpush1.msra.mxu0 0.0
        %450 = vmatprep.subr.mxu0 0.0
        %451 = vmatpush1.msra.mxu0 0.0
        %452 = vmatprep.subr.mxu0 0.0
        %453 = vmatpush1.msra.mxu0 0.0
        %454 = vmatprep.subr.mxu0 0.0
        %455 = vmatpush1.msra.mxu0 0.0
        %456 = vmatprep.subr.mxu0 0.0
        %457 = vmatpush1.msra.mxu0 0.0
        %458 = vmatprep.subr.mxu0 0.0
        %459 = vmatpush1.msra.mxu0 0.0
        %460 = vmatprep.subr.mxu0 0.0
        %461 = vmatpush1.msra.mxu0 0.0
        %462 = vmatprep.subr.mxu0 0.0
        %463 = vmatpush1.msra.mxu0 0.0
        %464 = vmatprep.subr.mxu0 0.0
        %465 = vmatpush1.msra.mxu0 0.0
        %466 = vmatprep.subr.mxu0 0.0
        %467 = vmatpush1.msra.mxu0 0.0
        %468 = vmatprep.subr.mxu0 0.0
        %469 = vmatpush1.msra.mxu0 0.0
        %470 = vmatprep.subr.mxu0 0.0
        %471 = vmatpush1.msra.mxu0 0.0
        %472 = vmatprep.subr.mxu0 0.0
        %473 = vmatpush1.msra.mxu0 0.0
        %474 = vmatprep.subr.mxu0 0.0
        %475 = vmatpush1.msra.mxu0 0.0
        %476 = vmatprep.subr.mxu0 0.0
        %477 = vmatpush1.msra.mxu0 0.0
        %478 = vmatprep.subr.mxu0 0.0
        %479 = vmatpush1.msra.mxu0 0.0
        %480 = vmatprep.subr.mxu0 0.0
        %481 = vmatpush1.msra.mxu0 0.0
        %482 = vmatprep.subr.mxu0 0.0
        %483 = vmatpush1.msra.mxu0 0.0
        %484 = vmatprep.subr.mxu0 0.0
        %485 = vmatpush1.msra.mxu0 0.0
        %486 = vmatprep.subr.mxu0 0.0
        %487 = vmatpush1.msra.mxu0 0.0
        %488 = vmatprep.subr.mxu0 0.0
        %489 = vmatpush1.msra.mxu0 0.0
        %490 = vmatprep.mubr.f32.mxu0 0.0
        %491 = vmatmul.mubr.f32.gmra.mrb[0].mxu0 %v415
        %v492 = vpop.f32.mrb[0].mxu0
        %v493 = vadd.f32 0.0, %v492
        %v494 = vpop.f32.mrb[0].mxu0
        %495 = vmatprep.mubr.f32.mxu0 0.0
        %496 = vmatmul.mubr.f32.gmra.mrb[0].mxu0 %v418
        %v497 = vpop.f32.mrb[0].mxu0
        %v498 = vadd.f32 0.0, %v497
        %v499 = vpop.f32.mrb[0].mxu0
        %500 = vmatprep.mubr.f32.mxu0 0.0
        %501 = vmatmul.mubr.f32.gmra.mrb[0].mxu0 %v421
        %v502 = vpop.f32.mrb[0].mxu0
        %v503 = vadd.f32 0.0, %v502
        %v504 = vpop.f32.mrb[0].mxu0
        %505 = vmatprep.mubr.f32.mxu0 0.0
        %506 = vmatmul.mubr.f32.gmra.mrb[0].mxu0 %v424
        %v507 = vpop.f32.mrb[0].mxu0
        %v508 = vadd.f32 0.0, %v507
        %v509 = vpop.f32.mrb[0].mxu0
        %510 = vdwg.mxu0
        %vm511 = vcmask 64512
        %512 = vst.msk [vmem:[%s245] sm:$0xff] %vm511, %v396
        %513 = vst.msk [vmem:[%s245 + $0x8] sm:$0xff] %vm511, %v401
        %514 = vst.msk [vmem:[%s245 + $0x10] sm:$0xff] %vm511, %v406
        %515 = vst.msk [vmem:[%s245 + $0x18] sm:$0xff] %vm511, %v411
        %520 = vrot.lane.b32.xlu0 %v396, 120
        %v521 = vpop.permute.xlu0 %520
        %522 = vrot.lane.b32.xlu0 %v401, 120
        %v523 = vpop.permute.xlu0 %522
        %524 = vrot.lane.b32.xlu0 %v406, 120
        %v525 = vpop.permute.xlu0 %524
        %526 = vrot.lane.b32.xlu0 %v411, 120
        %v527 = vpop.permute.xlu0 %526
        %532 = vst.msk [vmem:[%s252] sm:$0xff] %vm511, %v521
        %533 = vst.msk [vmem:[%s252 + $0x8] sm:$0xff] %vm511, %v523
        %534 = vst.msk [vmem:[%s252 + $0x10] sm:$0xff] %vm511, %v525
        %535 = vst.msk [vmem:[%s252 + $0x18] sm:$0xff] %vm511, %v527
        %536 = vst.msk [vmem:[%s259] sm:$0xff] %vm511, %v493
        %537 = vst.msk [vmem:[%s259 + $0x8] sm:$0xff] %vm511, %v498
        %538 = vst.msk [vmem:[%s259 + $0x10] sm:$0xff] %vm511, %v503
        %539 = vst.msk [vmem:[%s259 + $0x18] sm:$0xff] %vm511, %v508
        %544 = vrot.lane.b32.xlu0 %v493, 120
        %v545 = vpop.permute.xlu0 %544
        %546 = vrot.lane.b32.xlu0 %v498, 120
        %v547 = vpop.permute.xlu0 %546
        %548 = vrot.lane.b32.xlu0 %v503, 120
        %v549 = vpop.permute.xlu0 %548
        %550 = vrot.lane.b32.xlu0 %v508, 120
        %v551 = vpop.permute.xlu0 %550
        %556 = vst.msk [vmem:[%s266] sm:$0xff] %vm511, %v545
        %557 = vst.msk [vmem:[%s266 + $0x8] sm:$0xff] %vm511, %v547
        %558 = vst.msk [vmem:[%s266 + $0x10] sm:$0xff] %vm511, %v549
        %559 = vst.msk [vmem:[%s266 + $0x18] sm:$0xff] %vm511, %v551
        %s560 = sand.u32 %s78, 1
        %s561 = scalar_lea.sflag [#allocation4], %s560
        %s562 = sand.u32 %s78, 1
        %s563 = smul.addr %s562, 32
        %s564 = scalar_lea.vmem [#allocation5], %s563
        %s565 = sand.u32 %s28, 1
        %s566 = scalar_lea.sflag [#allocation7], %s565
        %s567 = sand.u32 %s106, 1
        %s568 = smul.addr %s567, 32
        %s569 = scalar_lea.vmem [#allocation6], %s568
        %s570 = sand.u32 %s28, 1
        %s571 = scalar_lea.sflag [#allocation7], %s570
        %s572 = sand.u32 %s134, 1
        %s573 = smul.addr %s572, 32
        %s574 = scalar_lea.vmem [#allocation8], %s573
        %s575 = sand.u32 %s162, 1
        %s576 = scalar_lea.sflag [#allocation10], %s575
        %s577 = sand.u32 %s162, 1
        %s578 = smul.addr %s577, 32
        %s579 = scalar_lea.vmem [#allocation9], %s578
        // Predicated region
        $region29: #{wave_pool.1} parent=23 // pred_check
          %p580 = pneg %p88
        $region30: #{wave_pool.1} parent=23 // pred_check_branch
          %582 = sbr.rel (%p580) target = $region32
        $region31: #{wave_pool.1} parent=23 // pred_region
          %s583 = smul.u32 4, %s32
          %s585 = ssub.s32 512, 512
          %586 = vsyncadd %s561, %s585
          %s587 = sadd.s32 %s33, %s583
          %s588 = smul.addr %s587, 128
          %s589 = scalar_lea.hbm %s1, %s588
          %s590 = sshll.u32 %s564, 4
          %s591 = int_to_ptr.vmem [resolvable:$true] %s590
          %596 = dma.vmem_to_hbm [thread:$0]  %s591, 512, %s589, %s561, 128, 128, 8
        $region32: #{wave_pool.1} parent=23 // pred_fallthru
          _
        // Predicated region
        $region33: #{wave_pool.1} parent=23 // pred_check
          %p597 = pneg %p116
        $region34: #{wave_pool.1} parent=23 // pred_check_branch
          %599 = sbr.rel (%p597) target = $region36
        $region35: #{wave_pool.1} parent=23 // pred_region
          %s600 = smul.u32 4, %s32
          %s602 = ssub.s32 512, 512
          %603 = vsyncadd %s566, %s602
          %s604 = sadd.s32 %s33, %s600
          %s605 = smul.addr %s604, 128
          %s606 = scalar_lea.hbm %s2, %s605
          %s607 = sshll.u32 %s569, 4
          %s608 = int_to_ptr.vmem [resolvable:$true] %s607
          %613 = dma.vmem_to_hbm [thread:$0]  %s608, 512, %s606, %s566, 128, 128, 8
        $region36: #{wave_pool.1} parent=23 // pred_fallthru
          _
        // Predicated region
        $region37: #{wave_pool.1} parent=23 // pred_check
          %p614 = pneg %p144
        $region38: #{wave_pool.1} parent=23 // pred_check_branch
          %616 = sbr.rel (%p614) target = $region40
        $region39: #{wave_pool.1} parent=23 // pred_region
          %s617 = smul.u32 4, %s32
          %s619 = ssub.s32 512, 512
          %620 = vsyncadd %s571, %s619
          %s621 = sadd.s32 %s33, %s617
          %s622 = smul.addr %s621, 128
          %s623 = scalar_lea.hbm %s3, %s622
          %s624 = sshll.u32 %s574, 4
          %s625 = int_to_ptr.vmem [resolvable:$true] %s624
          %630 = dma.vmem_to_hbm [thread:$0]  %s625, 512, %s623, %s571, 128, 128, 8
        $region40: #{wave_pool.1} parent=23 // pred_fallthru
          _
        // Predicated region
        $region41: #{wave_pool.1} parent=23 // pred_check
          %p631 = pneg %p172
        $region42: #{wave_pool.1} parent=23 // pred_check_branch
          %633 = sbr.rel (%p631) target = $region44
        $region43: #{wave_pool.1} parent=23 // pred_region
          %s634 = smul.u32 4, %s32
          %s636 = ssub.s32 512, 512
          %637 = vsyncadd %s576, %s636
          %s638 = sadd.s32 %s33, %s634
          %s639 = smul.addr %s638, 128
          %s640 = scalar_lea.hbm %s4, %s639
          %s641 = sshll.u32 %s579, 4
          %s642 = int_to_ptr.vmem [resolvable:$true] %s641
          %647 = dma.vmem_to_hbm [thread:$0]  %s642, 512, %s640, %s576, 128, 128, 8
        $region44: #{wave_pool.1} parent=23 // pred_fallthru
          _
      $region24: #{wave_pool.1} parent=5 // pred_fallthru
        _
      %p648 = scmp.le.s32.totalorder 2, %s23
      // Predicated region
      $region45: #{wave_pool.1} parent=5 // pred_check
        %p649 = pneg %p648
      $region46: #{wave_pool.1} parent=5 // pred_check_branch
        %651 = sbr.rel (%p649) target = $region48
      $region47: #{wave_pool.1} parent=5 // pred_region
        %s652 = ssub.s32 %s23, 2
        // Predicated region
        $region49: #{wave_pool.1} parent=47 // pred_check
          %p653 = pneg %p94
        $region50: #{wave_pool.1} parent=47 // pred_check_branch
          %655 = sbr.rel (%p653) target = $region52
        $region51: #{wave_pool.1} parent=47 // pred_region
          %s656 = sand.u32 %s79, 1
          %s657 = scalar_lea.sflag [#allocation4], %s656
          %s658 = sand.u32 %s79, 1
          %s659 = smul.addr %s658, 32
          %s660 = scalar_lea.vmem [#allocation5], %s659
          %661 = dma.done %s657, 512
        $region52: #{wave_pool.1} parent=47 // pred_fallthru
          _
        // Predicated region
        $region53: #{wave_pool.1} parent=47 // pred_check
          %p662 = pneg %p122
        $region54: #{wave_pool.1} parent=47 // pred_check_branch
          %664 = sbr.rel (%p662) target = $region56
        $region55: #{wave_pool.1} parent=47 // pred_region
          %s665 = sand.u32 %s29, 1
          %s666 = scalar_lea.sflag [#allocation7], %s665
          %s667 = sand.u32 %s107, 1
          %s668 = smul.addr %s667, 32
          %s669 = scalar_lea.vmem [#allocation6], %s668
          %670 = dma.done %s666, 512
        $region56: #{wave_pool.1} parent=47 // pred_fallthru
          _
        // Predicated region
        $region57: #{wave_pool.1} parent=47 // pred_check
          %p671 = pneg %p150
        $region58: #{wave_pool.1} parent=47 // pred_check_branch
          %673 = sbr.rel (%p671) target = $region60
        $region59: #{wave_pool.1} parent=47 // pred_region
          %s674 = sand.u32 %s29, 1
          %s675 = scalar_lea.sflag [#allocation7], %s674
          %s676 = sand.u32 %s135, 1
          %s677 = smul.addr %s676, 32
          %s678 = scalar_lea.vmem [#allocation8], %s677
          %679 = dma.done %s675, 512
        $region60: #{wave_pool.1} parent=47 // pred_fallthru
          _
        // Predicated region
        $region61: #{wave_pool.1} parent=47 // pred_check
          %p680 = pneg %p178
        $region62: #{wave_pool.1} parent=47 // pred_check_branch
          %682 = sbr.rel (%p680) target = $region64
        $region63: #{wave_pool.1} parent=47 // pred_region
          %s683 = sand.u32 %s163, 1
          %s684 = scalar_lea.sflag [#allocation10], %s683
          %s685 = sand.u32 %s163, 1
          %s686 = smul.addr %s685, 32
          %s687 = scalar_lea.vmem [#allocation9], %s686
          %688 = dma.done %s684, 512
        $region64: #{wave_pool.1} parent=47 // pred_fallthru
          _
      $region48: #{wave_pool.1} parent=5 // pred_fallthru
        _
    $region6: #{wave_pool.1} parent=1 // loop_footer
      %s27 = sadd.s32 1, %s23
    $region7: #{wave_pool.1} parent=1 // loop_footer_branch
      %22 = sbr.rel target = $region3
    $region8: #{wave_pool.1} parent=1 // loop_exit
      _
    %689 = vsyncpa [#allocation3], 1
    %s690 = scalar_lea.sflag [#allocation3], 1
    %691 = vsyncpa %s690, 1
    %692 = vsyncpa [#allocation4], 1
    %s693 = scalar_lea.sflag [#allocation4], 1
    %694 = vsyncpa %s693, 1
    %695 = vsyncpa [#allocation7], 1
    %s696 = scalar_lea.sflag [#allocation7], 1
    %697 = vsyncpa %s696, 1
    %698 = vsyncpa [#allocation10], 1
    %s699 = scalar_lea.sflag [#allocation10], 1
    %700 = vsyncpa %s699, 1

</llo_original>
